<compile_context>
chip_gen: v7x
topology: tpu7x:2x2x1
jax: 0.10.0
libtpu: 0.0.40
codegen_flags: <defaults>
</compile_context>

<pallas_src>
import jax
import jax.numpy as jnp
from jax.experimental import pallas as pl
from jax.experimental.pallas import tpu as pltpu


def _round_up(x: int, m: int) -> int:
    return (x + m - 1) // m * m


# Column-pad value: exp() underflows to exactly 0, so real-row softmaxes are
# unchanged; identical pads in both inputs give a pointwise term of exactly 0
# (finite, unlike -inf which would produce inf - inf = nan).
_NEG_FILL = -1e30


def _sym_kl_kernel(a_ref, b_ref, o_ref):
    a = a_ref[...].astype(jnp.float32)
    b = b_ref[...].astype(jnp.float32)

    # Numerically-stable softmax / log_softmax along the lane axis.
    # One exp per element (EUP slot); softmax derived from the same
    # exponentials via an exact per-row reciprocal multiply (approx reciprocal
    # would perturb the scalar loss beyond test tolerance).
    a_sh = a - jnp.max(a, axis=-1, keepdims=True)
    e_a = jnp.exp(a_sh)
    s_a = jnp.sum(e_a, axis=-1, keepdims=True)
    a_log = a_sh - jnp.log(s_a)          # log_softmax(fea1 rows)
    a_sm = e_a * (1.0 / s_a)             # softmax(fea1 rows)

    b_sh = b - jnp.max(b, axis=-1, keepdims=True)
    e_b = jnp.exp(b_sh)
    s_b = jnp.sum(e_b, axis=-1, keepdims=True)
    b_log = b_sh - jnp.log(s_b)          # log_softmax(fea2 rows)
    b_sm = e_b * (1.0 / s_b)             # softmax(fea2 rows)

    # Symmetric pointwise KL:
    #   b_sm*(b_log - a_log) + a_sm*(a_log - b_log) == (a_sm - b_sm)*(a_log - b_log)
    pt = (a_sm - b_sm) * (a_log - b_log)
    s = jnp.sum(pt)

    # Write the block partial sum into a lane-dense (8, 128) tile: value at
    # [0, 0], zeros elsewhere (the wrapper sums everything).
    row = jax.lax.broadcasted_iota(jnp.int32, (8, 128), 0)
    col = jax.lax.broadcasted_iota(jnp.int32, (8, 128), 1)
    o_ref[...] = jnp.where((row == 0) & (col == 0), s, 0.0).reshape(1, 8, 128)


@jax.jit
def kl_loss(fea1, fea2):
    """JAX/Pallas equivalent of KL_loss().forward(fea1, fea2).

    fea1, fea2: float arrays of shape (b, c, h, w, n). Returns scalar float32.
    """
    b, c, h, w, n = fea1.shape
    R = n * b * c
    L = h * w

    # Glue: bring the softmax axis (h*w) to the contiguous lane (last) dim.
    # TODO(synk): the transpose is materialized by XLA (extra HBM traffic);
    # fusing the per-i slicing into the kernel would need a strided DMA whose
    # lane dim is the tiny trailing `n` axis (vreg utilization n/128), which
    # is slower in practice, so the transposed lane-dense layout is kept.
    a2d = jnp.transpose(fea1, (4, 0, 1, 2, 3)).reshape(R, L)
    b2d = jnp.transpose(fea2, (4, 0, 1, 2, 3)).reshape(R, L)

    # Lane-align the softmax axis (pad cols -> exp == 0, contribution == 0).
    Lp = _round_up(L, 128)
    if Lp != L:
        a2d = jnp.pad(a2d, ((0, 0), (0, Lp - L)), constant_values=_NEG_FILL)
        b2d = jnp.pad(b2d, ((0, 0), (0, Lp - L)), constant_values=_NEG_FILL)

    # Row tile: target ~2 MiB per f32 input block (2 inputs x 2 pipeline
    # buffers + f32 temporaries fit every generation's scoped VMEM, incl.
    # v7x's 64 MiB physical VMEM), then rebalance across blocks so the padded
    # row count Rp stays as close to R as possible (minimal wasted DMA).
    bytes_per_row = Lp * 4
    tile_r_max = max(8, min(1024, (2 * 1024 * 1024) // bytes_per_row) // 8 * 8)
    num_blocks = -(-R // tile_r_max)                    # ceil
    tile_r = _round_up(-(-R // num_blocks), 8)          # balanced, multiple of 8
    Rp = num_blocks * tile_r
    if Rp != R:
        # Zero-filled rows (identical in both inputs) contribute exactly 0.
        a2d = jnp.pad(a2d, ((0, Rp - R), (0, 0)))
        b2d = jnp.pad(b2d, ((0, Rp - R), (0, 0)))

    partials = pl.pallas_call(
        _sym_kl_kernel,
        out_shape=jax.ShapeDtypeStruct((num_blocks, 8, 128), jnp.float32),
        grid=(num_blocks,),
        in_specs=[
            pl.BlockSpec((tile_r, Lp), lambda r: (r, 0)),
            pl.BlockSpec((tile_r, Lp), lambda r: (r, 0)),
        ],
        out_specs=pl.BlockSpec((1, 8, 128), lambda r: (r, 0, 0)),
        compiler_params=pltpu.CompilerParams(
            # Independent per-block outputs -> grid axis can shard across
            # both TensorCores on v7x; harmless on v5e/v6e.
            dimension_semantics=("parallel",),
            vmem_limit_bytes=32 * 1024 * 1024,
        ),
    )(a2d, b2d)

    total = jnp.sum(partials)
    # mean over (b*c*h*w) per slice, /2 for the symmetric average, summed over n.
    return total / jnp.float32(2.0 * b * c * h * w)


def _kl_loss_ref(fea1, fea2):
    """Pure-JAX reference mirroring the PyTorch module exactly."""
    b, c, h, w, n = fea1.shape
    loss = jnp.float32(0.0)
    for i in range(n):
        x = fea1[:, :, :, :, i].reshape(b * c, h * w).astype(jnp.float32)
        y = fea2[:, :, :, :, i].reshape(b * c, h * w).astype(jnp.float32)

        def kl_divs(x, y):
            xl = jax.nn.log_softmax(x, axis=-1)
            ys = jax.nn.softmax(y, axis=-1)
            return jnp.mean(ys * (jnp.log(ys) - xl))

        loss = loss + (kl_divs(x, y) + kl_divs(y, x)) / 2.0
    return loss


if __name__ == "__main__":
    key = jax.random.PRNGKey(0)

    # Test 1: small shape consistent with the module's (b, c, h, w, n) layout;
    # exercises column padding (h*w = 64 -> 128), single block.
    k1, k2 = jax.random.split(key)
    b, c, h, w, n = 2, 4, 8, 8, 3
    fea1 = jax.random.normal(k1, (b, c, h, w, n), dtype=jnp.float32)
    fea2 = jax.random.normal(k2, (b, c, h, w, n), dtype=jnp.float32)
    out = jax.block_until_ready(kl_loss(fea1, fea2))
    ref = jax.block_until_ready(_kl_loss_ref(fea1, fea2))
    assert jnp.allclose(out, ref, rtol=1e-5, atol=1e-6), (out, ref)

    # Test 2: moderate shape exercising multi-block tiling + row padding
    # (R = 540 rows, L = 1024, 2 blocks of 272 rows).
    k3, k4 = jax.random.split(k1)
    b2s, c2s, h2s, w2s, n2s = 2, 15, 32, 32, 18
    g1 = jax.random.normal(k3, (b2s, c2s, h2s, w2s, n2s), dtype=jnp.float32)
    g2 = jax.random.normal(k4, (b2s, c2s, h2s, w2s, n2s), dtype=jnp.float32)
    out2 = jax.block_until_ready(kl_loss(g1, g2))
    ref2 = jax.block_until_ready(_kl_loss_ref(g1, g2))
    assert jnp.allclose(out2, ref2, rtol=1e-4, atol=1e-6), (out2, ref2)

    print("KERNEL_OK")
</pallas_src>

<mosaic_0001>
module attributes {stable_mosaic.version = 11 : i64} {
  func.func @_sym_kl_kernel(%arg0: i32, %arg1: memref<24x128xf32, #tpu.memory_space<vmem>>, %arg2: memref<24x128xf32, #tpu.memory_space<vmem>>, %arg3: memref<1x8x128xf32, #tpu.memory_space<vmem>>) attributes {dimension_semantics = [#tpu.dimension_semantics<parallel>], iteration_bounds = array<i64: 1>, scalar_prefetch = 0 : i64, scratch_operands = 0 : i64, tpu.core_type = #tpu.core_type<tc>, window_params = [{transform_indices = @transform_0, window_bounds = array<i64: 24, 128>}, {transform_indices = @transform_1, window_bounds = array<i64: 24, 128>}, {transform_indices = @transform_2, window_bounds = array<i64: 1, 8, 128>}]} {
    %c0 = arith.constant 0 : index
    %c0_0 = arith.constant 0 : index
    %0 = vector.load %arg1[%c0, %c0_0] : memref<24x128xf32, #tpu.memory_space<vmem>>, vector<24x128xf32>
    %c0_1 = arith.constant 0 : index
    %c0_2 = arith.constant 0 : index
    %1 = vector.load %arg2[%c0_1, %c0_2] : memref<24x128xf32, #tpu.memory_space<vmem>>, vector<24x128xf32>
    %cst = arith.constant dense<0xFF800000> : vector<24xf32>
    %2 = vector.multi_reduction <maximumf>, %0, %cst [1] : vector<24x128xf32> to vector<24xf32>
    %3 = vector.shape_cast %2 : vector<24xf32> to vector<24x1xf32>
    %4 = vector.broadcast %3 : vector<24x1xf32> to vector<24x128xf32>
    %5 = arith.subf %0, %4 : vector<24x128xf32>
    %6 = math.exp %5 : vector<24x128xf32>
    %cst_3 = arith.constant dense<0.000000e+00> : vector<24xf32>
    %7 = vector.multi_reduction <add>, %6, %cst_3 [1] : vector<24x128xf32> to vector<24xf32>
    %8 = vector.shape_cast %7 : vector<24xf32> to vector<24x1xf32>
    %9 = math.log %8 : vector<24x1xf32>
    %10 = vector.broadcast %9 : vector<24x1xf32> to vector<24x128xf32>
    %11 = arith.subf %5, %10 : vector<24x128xf32>
    %cst_4 = arith.constant 1.000000e+00 : f32
    %12 = vector.broadcast %cst_4 : f32 to vector<24x1xf32>
    %13 = arith.divf %12, %8 : vector<24x1xf32>
    %14 = vector.broadcast %13 : vector<24x1xf32> to vector<24x128xf32>
    %15 = arith.mulf %6, %14 : vector<24x128xf32>
    %cst_5 = arith.constant dense<0xFF800000> : vector<24xf32>
    %16 = vector.multi_reduction <maximumf>, %1, %cst_5 [1] : vector<24x128xf32> to vector<24xf32>
    %17 = vector.shape_cast %16 : vector<24xf32> to vector<24x1xf32>
    %18 = vector.broadcast %17 : vector<24x1xf32> to vector<24x128xf32>
    %19 = arith.subf %1, %18 : vector<24x128xf32>
    %20 = math.exp %19 : vector<24x128xf32>
    %cst_6 = arith.constant dense<0.000000e+00> : vector<24xf32>
    %21 = vector.multi_reduction <add>, %20, %cst_6 [1] : vector<24x128xf32> to vector<24xf32>
    %22 = vector.shape_cast %21 : vector<24xf32> to vector<24x1xf32>
    %23 = math.log %22 : vector<24x1xf32>
    %24 = vector.broadcast %23 : vector<24x1xf32> to vector<24x128xf32>
    %25 = arith.subf %19, %24 : vector<24x128xf32>
    %cst_7 = arith.constant 1.000000e+00 : f32
    %26 = vector.broadcast %cst_7 : f32 to vector<24x1xf32>
    %27 = arith.divf %26, %22 : vector<24x1xf32>
    %28 = vector.broadcast %27 : vector<24x1xf32> to vector<24x128xf32>
    %29 = arith.mulf %20, %28 : vector<24x128xf32>
    %30 = arith.subf %15, %29 : vector<24x128xf32>
    %31 = arith.subf %11, %25 : vector<24x128xf32>
    %32 = arith.mulf %30, %31 : vector<24x128xf32>
    %33 = vector.shape_cast %32 : vector<24x128xf32> to vector<1x24x128xf32>
    %cst_8 = arith.constant dense<0.000000e+00> : vector<1xf32>
    %34 = vector.multi_reduction <add>, %33, %cst_8 [1, 2] : vector<1x24x128xf32> to vector<1xf32>
    %35 = vector.shape_cast %34 : vector<1xf32> to vector<1x1x1xf32>
    %36 = vector.extract %35[0, 0, 0] : f32 from vector<1x1x1xf32>
    %37 = tpu.iota {dimensions = array<i32: 0>} : vector<8x128xi32>
    %38 = tpu.iota {dimensions = array<i32: 1>} : vector<8x128xi32>
    %c0_i32 = arith.constant 0 : i32
    %39 = vector.broadcast %c0_i32 : i32 to vector<8x128xi32>
    %40 = arith.cmpi eq, %37, %39 : vector<8x128xi32>
    %c0_i32_9 = arith.constant 0 : i32
    %41 = vector.broadcast %c0_i32_9 : i32 to vector<8x128xi32>
    %42 = arith.cmpi eq, %38, %41 : vector<8x128xi32>
    %43 = arith.andi %40, %42 : vector<8x128xi1>
    %cst_10 = arith.constant 0.000000e+00 : f32
    %44 = vector.broadcast %36 : f32 to vector<8x128xf32>
    %45 = vector.broadcast %cst_10 : f32 to vector<8x128xf32>
    %46 = arith.select %43, %44, %45 : vector<8x128xi1>, vector<8x128xf32>
    %47 = vector.shape_cast %46 : vector<8x128xf32> to vector<1x8x128xf32>
    %c0_11 = arith.constant 0 : index
    %c0_12 = arith.constant 0 : index
    %c0_13 = arith.constant 0 : index
    %48 = vector.load %arg3[%c0_11, %c0_12, %c0_13] : memref<1x8x128xf32, #tpu.memory_space<vmem>>, vector<1x8x128xf32>
    tpu.vector_store %arg3[%c0_11, %c0_12, %c0_13], %47 {strides = array<i32>} : memref<1x8x128xf32, #tpu.memory_space<vmem>>, vector<1x8x128xf32>,
    return
  }
  func.func @transform_0(%arg0: i32) -> (i32, i32) {
    %c0_i32 = arith.constant 0 : i32
    %c0_i32_0 = arith.constant 0 : i32
    return %arg0, %c0_i32 : i32, i32
  }
  func.func @transform_1(%arg0: i32) -> (i32, i32) {
    %c0_i32 = arith.constant 0 : i32
    %c0_i32_0 = arith.constant 0 : i32
    return %arg0, %c0_i32 : i32, i32
  }
  func.func @transform_2(%arg0: i32) -> (i32, i32, i32) {
    %c0_i32 = arith.constant 0 : i32
    %c0_i32_0 = arith.constant 0 : i32
    %c0_i32_1 = arith.constant 0 : i32
    return %arg0, %c0_i32, %c0_i32_0 : i32, i32, i32
  }
}

</mosaic_0001>

<llo_original>
// kernel: kl_loss.1
$region0: #{kl_loss.1}
  #allocation0 [shape = 'u32[]', space=smem, size = 0x4, offset = 0x4, fixed_abs, tag = 'smem constant byte address 0x4 - core index']
  #allocation1 [shape = 'u32[144,128]{1,0:T(1,128)}', space=vmem, size = 0x12000, scoped, tag = 'internal scratch']
  %s0 = inlined_call_operand.vmem [shape: f32[24,128], index: 0, kind: input, shape index: {}]
  %s1 = inlined_call_operand.vmem [shape: f32[24,128], index: 1, kind: input, shape index: {}]
  %s2 = inlined_call_operand.vmem [shape: f32[1,8,128], index: 2, kind: output, shape index: {}]
  %s3 = sld [smem:[#allocation0]]
  $region18: #{kl_loss.1} parent=0
    _
  %s5 = ssub.s32 1, %s3
  %s6 = scalar_select 0, %s5, %s3
  // Predicated region
  $region2: #{kl_loss.1} parent=0 // pred_check
    _
  $region3: #{kl_loss.1} parent=0 // pred_check_branch
    %8 = sbr.rel (0) target = $region5
  $region4: #{kl_loss.1} parent=0 // pred_region
    _
  $region5: #{kl_loss.1} parent=0 // pred_fallthru
    _
  // Predicated region
  $region6: #{kl_loss.1} parent=0 // pred_check
    _
  $region7: #{kl_loss.1} parent=0 // pred_check_branch
    %10 = sbr.rel (0) target = $region9
  $region8: #{kl_loss.1} parent=0 // pred_region
    _
  $region9: #{kl_loss.1} parent=0 // pred_fallthru
    _
  %v11 = vld [vmem:[%s0] sm:$0xff]
  %v12 = vld [vmem:[%s0 + $0x8] sm:$0xff]
  %v13 = vld [vmem:[%s0 + $0x10] sm:$0xff]
  %v14 = vld [vmem:[%s1] sm:$0xff]
  %v15 = vld [vmem:[%s1 + $0x8] sm:$0xff]
  %v16 = vld [vmem:[%s1 + $0x10] sm:$0xff]
  %17 = vmax.xlane.f32.xlu0 %v11
  %v18 = vpop.xlane.xlu0 %17
  %19 = vmax.xlane.f32.xlu0 %v12
  %v20 = vpop.xlane.xlu0 %19
  %21 = vmax.xlane.f32.xlu0 %v13
  %v22 = vpop.xlane.xlu0 %21
  %v23 = vsub.f32 %v11, %v18
  %v24 = vsub.f32 %v12, %v20
  %v25 = vsub.f32 %v13, %v22
  %v26 = vmul.f32 %v23, 1.442695
  %v27 = vpow.pop %v26
  %v28 = vmul.f32 %v24, 1.442695
  %v29 = vpow.pop %v28
  %v30 = vmul.f32 %v25, 1.442695
  %v31 = vpow.pop %v30
  %32 = vadd.xlane.f32.xlu0 %v27
  %v33 = vpop.xlane.xlu0 %32
  %34 = vadd.xlane.f32.xlu0 %v29
  %v35 = vpop.xlane.xlu0 %34
  %36 = vadd.xlane.f32.xlu0 %v31
  %v37 = vpop.xlane.xlu0 %36
  %v38 = vlog2.pop %v33
  %v39 = vmul.f32 %v38, 0.6931472
  %v40 = vlog2.pop %v35
  %v41 = vmul.f32 %v40, 0.6931472
  %v42 = vlog2.pop %v37
  %v43 = vmul.f32 %v42, 0.6931472
  %v44 = vsub.f32 %v23, %v39
  %v45 = vsub.f32 %v24, %v41
  %v46 = vsub.f32 %v25, %v43
  %v47 = vrcp.pop %v33
  %v48 = vmul.f32 1.0, %v47
  %v49 = vrcp.pop %v35
  %v50 = vmul.f32 1.0, %v49
  %v51 = vrcp.pop %v37
  %v52 = vmul.f32 1.0, %v51
  %v53 = vmul.f32 %v27, %v48
  %v54 = vmul.f32 %v29, %v50
  %v55 = vmul.f32 %v31, %v52
  %56 = vmax.xlane.f32.xlu0 %v14
  %v57 = vpop.xlane.xlu0 %56
  %58 = vmax.xlane.f32.xlu0 %v15
  %v59 = vpop.xlane.xlu0 %58
  %60 = vmax.xlane.f32.xlu0 %v16
  %v61 = vpop.xlane.xlu0 %60
  %v62 = vsub.f32 %v14, %v57
  %v63 = vsub.f32 %v15, %v59
  %v64 = vsub.f32 %v16, %v61
  %v65 = vmul.f32 %v62, 1.442695
  %v66 = vpow.pop %v65
  %v67 = vmul.f32 %v63, 1.442695
  %v68 = vpow.pop %v67
  %v69 = vmul.f32 %v64, 1.442695
  %v70 = vpow.pop %v69
  %71 = vadd.xlane.f32.xlu0 %v66
  %v72 = vpop.xlane.xlu0 %71
  %73 = vadd.xlane.f32.xlu0 %v68
  %v74 = vpop.xlane.xlu0 %73
  %75 = vadd.xlane.f32.xlu0 %v70
  %v76 = vpop.xlane.xlu0 %75
  %v77 = vlog2.pop %v72
  %v78 = vmul.f32 %v77, 0.6931472
  %v79 = vlog2.pop %v74
  %v80 = vmul.f32 %v79, 0.6931472
  %v81 = vlog2.pop %v76
  %v82 = vmul.f32 %v81, 0.6931472
  %v83 = vsub.f32 %v62, %v78
  %v84 = vsub.f32 %v63, %v80
  %v85 = vsub.f32 %v64, %v82
  %v86 = vrcp.pop %v72
  %v87 = vmul.f32 1.0, %v86
  %v88 = vrcp.pop %v74
  %v89 = vmul.f32 1.0, %v88
  %v90 = vrcp.pop %v76
  %v91 = vmul.f32 1.0, %v90
  %v92 = vmul.f32 %v66, %v87
  %v93 = vmul.f32 %v68, %v89
  %v94 = vmul.f32 %v70, %v91
  %v95 = vsub.f32 %v53, %v92
  %v96 = vsub.f32 %v54, %v93
  %v97 = vsub.f32 %v55, %v94
  %v98 = vsub.f32 %v44, %v83
  %v99 = vsub.f32 %v45, %v84
  %v100 = vsub.f32 %v46, %v85
  %v101 = vmul.f32 %v95, %v98
  %v102 = vmul.f32 %v96, %v99
  %v103 = vmul.f32 %v97, %v100
  %v104 = vadd.f32 %v101, %v102
  %v105 = vadd.f32 %v104, %v103
  %106 = vadd.xlane.f32.xlu0 %v105
  %v107 = vpop.xlane.xlu0 %106
  %v108 = vrot.slane %v107, 4
  %v109 = vadd.f32 %v107, %v108
  %v110 = vrot.slane %v109, 2
  %v111 = vadd.f32 %v109, %v110
  %v112 = vrot.slane %v111, 1
  %v113 = vadd.f32 %v111, %v112
  %s114 = vtos %v113
  %v115 = vlaneseq
  %v116 = vshrl.u32 %v115, 7
  %v117 = vlaneseq
  %v118 = vand.u32 %v117, 127
  %vm119 = vcmp.eq.s32.totalorder %v116, 0
  %vm120 = vcmp.eq.s32.totalorder %v118, 0
  %vm121 = vmand %vm119, %vm120
  %v122 = vstv %s114
  %v123 = vsel %vm121, %v122, 0.0
  %124 = vst [vmem:[%s2] sm:$0xff] %v123
  // Predicated region
  $region10: #{kl_loss.1} parent=0 // pred_check
    _
  $region11: #{kl_loss.1} parent=0 // pred_check_branch
    %126 = sbr.rel (0) target = $region13
  $region12: #{kl_loss.1} parent=0 // pred_region
    _
  $region13: #{kl_loss.1} parent=0 // pred_fallthru
    _
  // Predicated region
  $region14: #{kl_loss.1} parent=0 // pred_check
    _
  $region15: #{kl_loss.1} parent=0 // pred_check_branch
    %128 = sbr.rel (0) target = $region17
  $region16: #{kl_loss.1} parent=0 // pred_region
    _
  $region17: #{kl_loss.1} parent=0 // pred_fallthru
    _

</llo_original>
